<compile_context>
chip_gen: v6e
topology: v6e:2x2x1
jax: 0.10.0
libtpu: 0.0.40
codegen_flags: <defaults>
</compile_context>

<pallas_src>
import jax
import jax.numpy as jnp
from jax.experimental import pallas as pl
from jax.experimental.pallas import tpu as pltpu

_SELU_ALPHA = 1.6732632423543772848170429916717
_SELU_SCALE = 1.0507009873554804934193349852946


def _selu(h):
    return _SELU_SCALE * jnp.where(h > 0, h, _SELU_ALPHA * (jnp.exp(h) - 1.0))


def _round_up(n, m):
    return ((n + m - 1) // m) * m


def _mlp_kernel(t_ref, x_ref, w1x_ref, w1t_ref, b1_ref, w2_ref, b2_ref, o_ref):
    # t_ref: SMEM (1,) scalar-prefetch. x_ref: (TILE_B, Dp). Weights resident.
    t = t_ref[0]
    # (1, Hp) bias row computed once per grid step, single broadcast add below.
    bias_row = t * w1t_ref[...] + b1_ref[...]
    h = jnp.dot(x_ref[...], w1x_ref[...], preferred_element_type=jnp.float32)
    h = _selu(h + bias_row)
    o = jnp.dot(h, w2_ref[...], preferred_element_type=jnp.float32) + b2_ref[...]
    o_ref[...] = o.astype(o_ref.dtype)


class PallasTorchWrapper:
    """JAX/Pallas equivalent of torch_wrapper(model=MLP, perturbation=...)."""

    def __init__(self, dim, hidden, perturbation=None, seed=0):
        self.dim = dim
        self.hidden = hidden
        self.perturbation = (None if perturbation is None
                             else jnp.asarray(perturbation, jnp.float32).reshape(-1))
        p = 0 if self.perturbation is None else int(self.perturbation.shape[0])
        in_dim = dim + p + 1  # [x, (pert), t]

        key = jax.random.PRNGKey(seed)
        k1, k2, k3, k4 = jax.random.split(key, 4)
        s1 = 1.0 / float(in_dim) ** 0.5
        s2 = 1.0 / float(hidden) ** 0.5
        w1 = jax.random.uniform(k1, (in_dim, hidden), jnp.float32, -s1, s1)
        b1 = jax.random.uniform(k2, (1, hidden), jnp.float32, -s1, s1)
        w2 = jax.random.uniform(k3, (hidden, dim), jnp.float32, -s2, s2)
        b2 = jax.random.uniform(k4, (1, dim), jnp.float32, -s2, s2)

        # Split W1 rows to match cat([x, pert, t]) @ W1 exactly, and fold the
        # static perturbation contribution into the bias (host-side, once).
        w1x = w1[:dim]                          # (D, H)
        w1p = w1[dim:dim + p]                   # (P, H) or (0, H)
        w1t = w1[dim + p:dim + p + 1]           # (1, H)
        if p > 0:
            b1_eff = b1 + self.perturbation[None, :] @ w1p
        else:
            b1_eff = b1

        # Unpadded copies for the pure-JAX reference (mirrors the PyTorch code).
        self._w1_full, self._b1, self._w2, self._b2 = w1, b1, w2, b2

        # Zero-pad feature dims to lane multiples (128): lane-dense output
        # stores and full MXU N. Padding is exact (zeros contribute nothing).
        self.d_pad = _round_up(dim, 128)
        self.h_pad = _round_up(hidden, 128)
        Dp, Hp = self.d_pad, self.h_pad
        self.w1x_p = jnp.zeros((Dp, Hp), jnp.float32).at[:dim, :hidden].set(w1x)
        self.w1t_p = jnp.zeros((1, Hp), jnp.float32).at[:, :hidden].set(w1t)
        self.b1_p = jnp.zeros((1, Hp), jnp.float32).at[:, :hidden].set(b1_eff)
        self.w2_p = jnp.zeros((Hp, Dp), jnp.float32).at[:hidden, :dim].set(w2)
        self.b2_p = jnp.zeros((1, Dp), jnp.float32).at[:, :dim].set(b2)

    def __call__(self, t, x):
        B, D = x.shape
        assert D == self.dim
        Dp, Hp = self.d_pad, self.h_pad

        # Batch tile: multiple of 8 (f32 sublane), up to 512 rows per grid step.
        tile_b = min(512, _round_up(B, 8))
        b_pad = _round_up(B, tile_b)
        grid = (b_pad // tile_b,)

        x_p = x.astype(jnp.float32)
        if (b_pad, Dp) != (B, D):
            x_p = jnp.zeros((b_pad, Dp), jnp.float32).at[:B, :D].set(x_p)

        t_arr = jnp.asarray(t, jnp.float32).reshape((1,))

        # Advisory cost for XLA scheduling around the ODE-integration loop.
        cost = pl.CostEstimate(
            flops=2 * b_pad * (Dp * Hp + Hp * Dp),
            transcendentals=b_pad * Hp,
            bytes_accessed=4 * (2 * b_pad * Dp + Dp * Hp + Hp * Dp + 3 * Hp + Dp),
        )

        # VMEM budget: resident weights + double-buffered x/out tiles + live h.
        vmem_needed = 4 * (Dp * Hp + Hp * Dp + 3 * Hp + Dp
                           + 2 * tile_b * Dp * 2 + tile_b * Hp)
        vmem_limit = int(min(max(2 * vmem_needed, 16 * 1024 * 1024),
                             48 * 1024 * 1024))

        fn = pl.pallas_call(
            _mlp_kernel,
            out_shape=jax.ShapeDtypeStruct((b_pad, Dp), jnp.float32),
            grid_spec=pltpu.PrefetchScalarGridSpec(
                num_scalar_prefetch=1,          # t lands in SMEM
                grid=grid,
                in_specs=[
                    pl.BlockSpec((tile_b, Dp), lambda i, t_s: (i, 0)),  # x tile
                    pl.BlockSpec((Dp, Hp), lambda i, t_s: (0, 0)),      # w1x (resident)
                    pl.BlockSpec((1, Hp), lambda i, t_s: (0, 0)),       # w1t
                    pl.BlockSpec((1, Hp), lambda i, t_s: (0, 0)),       # b1_eff
                    pl.BlockSpec((Hp, Dp), lambda i, t_s: (0, 0)),      # w2 (resident)
                    pl.BlockSpec((1, Dp), lambda i, t_s: (0, 0)),       # b2
                ],
                out_specs=pl.BlockSpec((tile_b, Dp), lambda i, t_s: (i, 0)),
            ),
            compiler_params=pltpu.CompilerParams(
                dimension_semantics=("parallel",),
                vmem_limit_bytes=vmem_limit,
            ),
            cost_estimate=cost,
        )
        out = fn(t_arr, x_p, self.w1x_p, self.w1t_p, self.b1_p,
                 self.w2_p, self.b2_p)
        return out[:B, :D]

    # Pure-JAX reference that mirrors the PyTorch code literally (explicit cat).
    def reference(self, t, x):
        B = x.shape[0]
        t_col = jnp.full((B, 1), jnp.asarray(t, jnp.float32))
        if self.perturbation is not None:
            pert_rep = jnp.broadcast_to(self.perturbation[None, :],
                                        (B, self.perturbation.shape[0]))
            z = jnp.concatenate([x, pert_rep, t_col], axis=1)
        else:
            z = jnp.concatenate([x, t_col], axis=1)
        h = _selu(z @ self._w1_full + self._b1)
        return h @ self._w2 + self._b2


if __name__ == "__main__":
    B, D, P, H = 8, 32, 16, 64
    key = jax.random.PRNGKey(0)
    kx, kp, kt = jax.random.split(key, 3)
    x = jax.random.normal(kx, (B, D), jnp.float32)
    perturbation = jax.random.normal(kp, (P,), jnp.float32)
    t = jax.random.uniform(kt, (), jnp.float32)

    # Branch 1: with perturbation.
    wrap = PallasTorchWrapper(dim=D, hidden=H, perturbation=perturbation, seed=0)
    out = jax.block_until_ready(wrap(t, x))
    ref = wrap.reference(t, x)
    assert out.shape == (B, D)
    assert jnp.allclose(out, ref, atol=1e-5, rtol=1e-5)

    # Branch 2: perturbation is None.
    wrap_np = PallasTorchWrapper(dim=D, hidden=H, perturbation=None, seed=1)
    out_np = jax.block_until_ready(wrap_np(t, x))
    ref_np = wrap_np.reference(t, x)
    assert out_np.shape == (B, D)
    assert jnp.allclose(out_np, ref_np, atol=1e-5, rtol=1e-5)

    print("KERNEL_OK")
</pallas_src>

<mosaic_0001>
module attributes {stable_mosaic.version = 11 : i64} {
  func.func @_mlp_kernel(%arg0: i32, %arg1: memref<1xf32, #tpu.memory_space<smem>>, %arg2: memref<8x128xf32, #tpu.memory_space<vmem>>, %arg3: memref<128x128xf32, #tpu.memory_space<vmem>>, %arg4: memref<1x128xf32, #tpu.memory_space<vmem>>, %arg5: memref<1x128xf32, #tpu.memory_space<vmem>>, %arg6: memref<128x128xf32, #tpu.memory_space<vmem>>, %arg7: memref<1x128xf32, #tpu.memory_space<vmem>>, %arg8: memref<8x128xf32, #tpu.memory_space<vmem>>) attributes {dimension_semantics = [#tpu.dimension_semantics<parallel>], iteration_bounds = array<i64: 1>, scalar_prefetch = 1 : i64, scratch_operands = 0 : i64, tpu.core_type = #tpu.core_type<tc>, window_params = [{transform_indices = @transform_0, window_bounds = array<i64: 8, 128>}, {pipeline_mode = #tpu.pipeline_mode<synchronous>, transform_indices = @transform_1, window_bounds = array<i64: 128, 128>}, {pipeline_mode = #tpu.pipeline_mode<synchronous>, transform_indices = @transform_2, window_bounds = array<i64: 1, 128>}, {pipeline_mode = #tpu.pipeline_mode<synchronous>, transform_indices = @transform_3, window_bounds = array<i64: 1, 128>}, {pipeline_mode = #tpu.pipeline_mode<synchronous>, transform_indices = @transform_4, window_bounds = array<i64: 128, 128>}, {pipeline_mode = #tpu.pipeline_mode<synchronous>, transform_indices = @transform_5, window_bounds = array<i64: 1, 128>}, {transform_indices = @transform_6, window_bounds = array<i64: 8, 128>}]} {
    %c0 = arith.constant 0 : index
    %0 = memref.load %arg1[%c0] : memref<1xf32, #tpu.memory_space<smem>>
    %c0_0 = arith.constant 0 : index
    %c0_1 = arith.constant 0 : index
    %1 = vector.load %arg4[%c0_0, %c0_1] : memref<1x128xf32, #tpu.memory_space<vmem>>, vector<1x128xf32>
    %2 = vector.broadcast %0 : f32 to vector<1x128xf32>
    %3 = arith.mulf %2, %1 : vector<1x128xf32>
    %c0_2 = arith.constant 0 : index
    %c0_3 = arith.constant 0 : index
    %4 = vector.load %arg5[%c0_2, %c0_3] : memref<1x128xf32, #tpu.memory_space<vmem>>, vector<1x128xf32>
    %5 = arith.addf %3, %4 : vector<1x128xf32>
    %c0_4 = arith.constant 0 : index
    %c0_5 = arith.constant 0 : index
    %6 = vector.load %arg2[%c0_4, %c0_5] : memref<8x128xf32, #tpu.memory_space<vmem>>, vector<8x128xf32>
    %c0_6 = arith.constant 0 : index
    %c0_7 = arith.constant 0 : index
    %7 = vector.load %arg3[%c0_6, %c0_7] : memref<128x128xf32, #tpu.memory_space<vmem>>, vector<128x128xf32>
    %cst = arith.constant dense<0.000000e+00> : vector<8x128xf32>
    %8 = tpu.matmul %6, %7, %cst {dimension_numbers = #tpu.dot_dimension_numbers<[1], [0], [0], [1], [0, 0, 1, 1], [], []>} : vector<8x128xf32>, vector<128x128xf32>, vector<8x128xf32> -> vector<8x128xf32>
    %9 = vector.broadcast %5 : vector<1x128xf32> to vector<8x128xf32>
    %10 = arith.addf %8, %9 : vector<8x128xf32>
    %cst_8 = arith.constant 0.000000e+00 : f32
    %11 = vector.broadcast %cst_8 : f32 to vector<8x128xf32>
    %12 = arith.cmpf ogt, %10, %11 : vector<8x128xf32>
    %13 = math.exp %10 : vector<8x128xf32>
    %cst_9 = arith.constant 1.000000e+00 : f32
    %14 = vector.broadcast %cst_9 : f32 to vector<8x128xf32>
    %15 = arith.subf %13, %14 : vector<8x128xf32>
    %cst_10 = arith.constant 1.67326319 : f32
    %16 = vector.broadcast %cst_10 : f32 to vector<8x128xf32>
    %17 = arith.mulf %16, %15 : vector<8x128xf32>
    %18 = arith.select %12, %10, %17 : vector<8x128xi1>, vector<8x128xf32>
    %cst_11 = arith.constant 1.05070102 : f32
    %19 = vector.broadcast %cst_11 : f32 to vector<8x128xf32>
    %20 = arith.mulf %19, %18 : vector<8x128xf32>
    %c0_12 = arith.constant 0 : index
    %c0_13 = arith.constant 0 : index
    %21 = vector.load %arg6[%c0_12, %c0_13] : memref<128x128xf32, #tpu.memory_space<vmem>>, vector<128x128xf32>
    %cst_14 = arith.constant dense<0.000000e+00> : vector<8x128xf32>
    %22 = tpu.matmul %20, %21, %cst_14 {dimension_numbers = #tpu.dot_dimension_numbers<[1], [0], [0], [1], [0, 0, 1, 1], [], []>} : vector<8x128xf32>, vector<128x128xf32>, vector<8x128xf32> -> vector<8x128xf32>
    %c0_15 = arith.constant 0 : index
    %c0_16 = arith.constant 0 : index
    %23 = vector.load %arg7[%c0_15, %c0_16] : memref<1x128xf32, #tpu.memory_space<vmem>>, vector<1x128xf32>
    %24 = vector.broadcast %23 : vector<1x128xf32> to vector<8x128xf32>
    %25 = arith.addf %22, %24 : vector<8x128xf32>
    %c0_17 = arith.constant 0 : index
    %c0_18 = arith.constant 0 : index
    %26 = vector.load %arg8[%c0_17, %c0_18] : memref<8x128xf32, #tpu.memory_space<vmem>>, vector<8x128xf32>
    tpu.vector_store %arg8[%c0_17, %c0_18], %25 {strides = array<i32>} : memref<8x128xf32, #tpu.memory_space<vmem>>, vector<8x128xf32>,
    return
  }
  func.func @transform_0(%arg0: i32, %arg1: memref<1xf32, #tpu.memory_space<smem>>) -> (i32, i32) {
    %c0_i32 = arith.constant 0 : i32
    %c0_i32_0 = arith.constant 0 : i32
    return %arg0, %c0_i32 : i32, i32
  }
  func.func @transform_1(%arg0: i32, %arg1: memref<1xf32, #tpu.memory_space<smem>>) -> (i32, i32) {
    %c0_i32 = arith.constant 0 : i32
    %c0_i32_0 = arith.constant 0 : i32
    %c0_i32_1 = arith.constant 0 : i32
    return %c0_i32, %c0_i32_0 : i32, i32
  }
  func.func @transform_2(%arg0: i32, %arg1: memref<1xf32, #tpu.memory_space<smem>>) -> (i32, i32) {
    %c0_i32 = arith.constant 0 : i32
    %c0_i32_0 = arith.constant 0 : i32
    %c0_i32_1 = arith.constant 0 : i32
    return %c0_i32, %c0_i32_0 : i32, i32
  }
  func.func @transform_3(%arg0: i32, %arg1: memref<1xf32, #tpu.memory_space<smem>>) -> (i32, i32) {
    %c0_i32 = arith.constant 0 : i32
    %c0_i32_0 = arith.constant 0 : i32
    %c0_i32_1 = arith.constant 0 : i32
    return %c0_i32, %c0_i32_0 : i32, i32
  }
  func.func @transform_4(%arg0: i32, %arg1: memref<1xf32, #tpu.memory_space<smem>>) -> (i32, i32) {
    %c0_i32 = arith.constant 0 : i32
    %c0_i32_0 = arith.constant 0 : i32
    %c0_i32_1 = arith.constant 0 : i32
    return %c0_i32, %c0_i32_0 : i32, i32
  }
  func.func @transform_5(%arg0: i32, %arg1: memref<1xf32, #tpu.memory_space<smem>>) -> (i32, i32) {
    %c0_i32 = arith.constant 0 : i32
    %c0_i32_0 = arith.constant 0 : i32
    %c0_i32_1 = arith.constant 0 : i32
    return %c0_i32, %c0_i32_0 : i32, i32
  }
  func.func @transform_6(%arg0: i32, %arg1: memref<1xf32, #tpu.memory_space<smem>>) -> (i32, i32) {
    %c0_i32 = arith.constant 0 : i32
    %c0_i32_0 = arith.constant 0 : i32
    return %arg0, %c0_i32 : i32, i32
  }
}

</mosaic_0001>

<llo_original>
// kernel: tpu_custom_call.1
$region0: #{tpu_custom_call.1}
  #allocation0 [shape = 'u32[]', space=smem, size = 0x4, offset = 0x4, fixed_abs, tag = 'smem constant byte address 0x4 - core index']
  #allocation1 [shape = 'u32[144,128]{1,0:T(1,128)}', space=vmem, size = 0x12000, scoped, tag = 'internal scratch']
  #allocation2 [shape = 's32[1]{0}', space=sflag, size = 0x4, scoped, tag = 'scoped memory for tpu_custom_call.1']
  #allocation3 [shape = 'f32[1]{0:T(128)S(6)}', space=smem, size = 0x200, scoped, tag = 'prefetched SMEM operand 0']
  %s0 = inlined_call_operand.<no memory space> [shape: f32[1], index: 0, kind: input, shape index: {}]
  %s1 = inlined_call_operand.hbm [shape: f32[8,128], index: 1, kind: input, shape index: {}]
  %s2 = inlined_call_operand.hbm [shape: f32[128,128], index: 2, kind: input, shape index: {}]
  %s3 = inlined_call_operand.vmem [shape: f32[1,128], index: 3, kind: input, shape index: {}]
  %s4 = inlined_call_operand.vmem [shape: f32[1,128], index: 4, kind: input, shape index: {}]
  %s5 = inlined_call_operand.hbm [shape: f32[128,128], index: 5, kind: input, shape index: {}]
  %s6 = inlined_call_operand.vmem [shape: f32[1,128], index: 6, kind: input, shape index: {}]
  %s7 = inlined_call_operand.hbm [shape: f32[8,128], index: 7, kind: output, shape index: {}]
  %s8 = sld [smem:[#allocation0]]
  $region46: #{tpu_custom_call.1} parent=0
    _
  %s10 = ssub.s32 1, %s8
  %s11 = scalar_select 0, %s10, %s8
  %12 = sst [smem:[#allocation3]] %s0
  $region1: #{tpu_custom_call.1} parent=0
    #allocation4 [shape = 'u8[4096]{0}', space=vmem, size = 0x1000, scoped, tag = 'input window, operand 1, single buffered']
    #allocation5 [shape = 's32[1]{0}', space=sflag, size = 0x4, scoped, tag = 'scoped memory for tpu_custom_call.1']
    #allocation6 [shape = 's32[1]{0}', space=sflag, size = 0x4, scoped, tag = 'scoped memory for tpu_custom_call.1']
    #allocation7 [shape = 'u8[65536]{0}', space=vmem, size = 0x10000, scoped, tag = 'input window, operand 2, single buffered']
    #allocation8 [shape = 's32[1]{0}', space=sflag, size = 0x4, scoped, tag = 'scoped memory for tpu_custom_call.1']
    #allocation9 [shape = 'u8[65536]{0}', space=vmem, size = 0x10000, scoped, tag = 'input window, operand 5, single buffered']
    #allocation10 [shape = 'u8[4096]{0}', space=vmem, size = 0x1000, scoped, tag = 'output window, operand 0, single buffered']
    %13 = vsyncpa [#allocation5], 0
    %14 = vsyncpa [#allocation8], 0
    %15 = vsyncpa [#allocation6], 0
    // Predicated region
    $region2: #{tpu_custom_call.1} parent=1 // pred_check
      _
    $region3: #{tpu_custom_call.1} parent=1 // pred_check_branch
      %17 = sbr.rel (0) target = $region5
    $region4: #{tpu_custom_call.1} parent=1 // pred_region
      %s19 = ssub.s32 128, 128
      %20 = vsyncadd [#allocation5], %s19
      %s22 = sshll.u32 [#allocation4], 4
      %s23 = int_to_ptr.vmem [resolvable:$true] %s22
      %25 = dma.hbm_to_vmem [thread:$0]  %s1, 128, %s23, [#allocation5]
    $region5: #{tpu_custom_call.1} parent=1 // pred_fallthru
      _
    // Predicated region
    $region6: #{tpu_custom_call.1} parent=1 // pred_check
      _
    $region7: #{tpu_custom_call.1} parent=1 // pred_check_branch
      %27 = sbr.rel (0) target = $region9
    $region8: #{tpu_custom_call.1} parent=1 // pred_region
      %s29 = ssub.s32 2048, 2048
      %30 = vsyncadd [#allocation8], %s29
      %s31 = sshll.u32 [#allocation7], 4
      %s32 = int_to_ptr.vmem [resolvable:$true] %s31
      %37 = dma.hbm_to_vmem [thread:$0]  %s2, 2048, %s32, [#allocation8], 128, 128, 8
    $region9: #{tpu_custom_call.1} parent=1 // pred_fallthru
      _
    // Predicated region
    $region10: #{tpu_custom_call.1} parent=1 // pred_check
      _
    $region11: #{tpu_custom_call.1} parent=1 // pred_check_branch
      %39 = sbr.rel (0) target = $region13
    $region12: #{tpu_custom_call.1} parent=1 // pred_region
      _
    $region13: #{tpu_custom_call.1} parent=1 // pred_fallthru
      _
    // Predicated region
    $region14: #{tpu_custom_call.1} parent=1 // pred_check
      _
    $region15: #{tpu_custom_call.1} parent=1 // pred_check_branch
      %41 = sbr.rel (0) target = $region17
    $region16: #{tpu_custom_call.1} parent=1 // pred_region
      _
    $region17: #{tpu_custom_call.1} parent=1 // pred_fallthru
      _
    // Predicated region
    $region18: #{tpu_custom_call.1} parent=1 // pred_check
      _
    $region19: #{tpu_custom_call.1} parent=1 // pred_check_branch
      %43 = sbr.rel (0) target = $region21
    $region20: #{tpu_custom_call.1} parent=1 // pred_region
      %s45 = ssub.s32 2048, 2048
      %46 = vsyncadd [#allocation8], %s45
      %s47 = sshll.u32 [#allocation9], 4
      %s48 = int_to_ptr.vmem [resolvable:$true] %s47
      %53 = dma.hbm_to_vmem [thread:$0]  %s5, 2048, %s48, [#allocation8], 128, 128, 8
    $region21: #{tpu_custom_call.1} parent=1 // pred_fallthru
      _
    // Predicated region
    $region22: #{tpu_custom_call.1} parent=1 // pred_check
      _
    $region23: #{tpu_custom_call.1} parent=1 // pred_check_branch
      %55 = sbr.rel (0) target = $region25
    $region24: #{tpu_custom_call.1} parent=1 // pred_region
      _
    $region25: #{tpu_custom_call.1} parent=1 // pred_fallthru
      _
    // Predicated region
    $region26: #{tpu_custom_call.1} parent=1 // pred_check
      _
    $region27: #{tpu_custom_call.1} parent=1 // pred_check_branch
      %57 = sbr.rel (0) target = $region29
    $region28: #{tpu_custom_call.1} parent=1 // pred_region
      %58 = dma.done [#allocation5], 128
    $region29: #{tpu_custom_call.1} parent=1 // pred_fallthru
      _
    // Predicated region
    $region30: #{tpu_custom_call.1} parent=1 // pred_check
      _
    $region31: #{tpu_custom_call.1} parent=1 // pred_check_branch
      %60 = sbr.rel (0) target = $region33
    $region32: #{tpu_custom_call.1} parent=1 // pred_region
      %61 = dma.done [#allocation8], 2048
    $region33: #{tpu_custom_call.1} parent=1 // pred_fallthru
      _
    // Predicated region
    $region34: #{tpu_custom_call.1} parent=1 // pred_check
      _
    $region35: #{tpu_custom_call.1} parent=1 // pred_check_branch
      %63 = sbr.rel (0) target = $region37
    $region36: #{tpu_custom_call.1} parent=1 // pred_region
      %64 = dma.done [#allocation8], 2048
    $region37: #{tpu_custom_call.1} parent=1 // pred_fallthru
      _
    %s65 = sld [smem:[#allocation3]]
    %v66 = vld [vmem:[%s3] sm:$0x1]
    %v67 = vstv %s65
    %v68 = vmul.f32 %v67, %v66
    %v69 = vld [vmem:[%s4] sm:$0x1]
    %v70 = vadd.f32 %v68, %v69
    %v71 = vld [vmem:[#allocation4] sm:$0xff]
    %v72 = vld [vmem:[#allocation7] sm:$0xff]
    %v73 = vld [vmem:[#allocation7 + $0x8] sm:$0xff]
    %v74 = vld [vmem:[#allocation7 + $0x10] sm:$0xff]
    %v75 = vld [vmem:[#allocation7 + $0x18] sm:$0xff]
    %v76 = vld [vmem:[#allocation7 + $0x20] sm:$0xff]
    %v77 = vld [vmem:[#allocation7 + $0x28] sm:$0xff]
    %v78 = vld [vmem:[#allocation7 + $0x30] sm:$0xff]
    %v79 = vld [vmem:[#allocation7 + $0x38] sm:$0xff]
    %v80 = vld [vmem:[#allocation7 + $0x40] sm:$0xff]
    %v81 = vld [vmem:[#allocation7 + $0x48] sm:$0xff]
    %v82 = vld [vmem:[#allocation7 + $0x50] sm:$0xff]
    %v83 = vld [vmem:[#allocation7 + $0x58] sm:$0xff]
    %v84 = vld [vmem:[#allocation7 + $0x60] sm:$0xff]
    %v85 = vld [vmem:[#allocation7 + $0x68] sm:$0xff]
    %v86 = vld [vmem:[#allocation7 + $0x70] sm:$0xff]
    %v87 = vld [vmem:[#allocation7 + $0x78] sm:$0xff]
    %v89 = vlaneseq
    %v90 = vshrl.u32 %v89, 7
    %v91 = vsub.s32 0, %v90
    %v92 = vrot.slane %v70, %v91
    %94 = vmatprep.subr.mxu0 0.0
    %95 = vmatpush1.msra.mxu0 %v87
    %96 = vmatprep.subr.mxu0 0.0
    %97 = vmatpush1.msra.mxu0 %v86
    %98 = vmatprep.subr.mxu0 0.0
    %99 = vmatpush1.msra.mxu0 %v85
    %100 = vmatprep.subr.mxu0 0.0
    %101 = vmatpush1.msra.mxu0 %v84
    %102 = vmatprep.subr.mxu0 0.0
    %103 = vmatpush1.msra.mxu0 %v83
    %104 = vmatprep.subr.mxu0 0.0
    %105 = vmatpush1.msra.mxu0 %v82
    %106 = vmatprep.subr.mxu0 0.0
    %107 = vmatpush1.msra.mxu0 %v81
    %108 = vmatprep.subr.mxu0 0.0
    %109 = vmatpush1.msra.mxu0 %v80
    %110 = vmatprep.subr.mxu0 0.0
    %111 = vmatpush1.msra.mxu0 %v79
    %112 = vmatprep.subr.mxu0 0.0
    %113 = vmatpush1.msra.mxu0 %v78
    %114 = vmatprep.subr.mxu0 0.0
    %115 = vmatpush1.msra.mxu0 %v77
    %116 = vmatprep.subr.mxu0 0.0
    %117 = vmatpush1.msra.mxu0 %v76
    %118 = vmatprep.subr.mxu0 0.0
    %119 = vmatpush1.msra.mxu0 %v75
    %120 = vmatprep.subr.mxu0 0.0
    %121 = vmatpush1.msra.mxu0 %v74
    %122 = vmatprep.subr.mxu0 0.0
    %123 = vmatpush1.msra.mxu0 %v73
    %124 = vmatprep.subr.mxu0 0.0
    %125 = vmatpush1.msra.mxu0 %v72
    %126 = vmatprep.subr.mxu0 0.0
    %127 = vmatpush2.msra.mxu0 0.0
    %128 = vmatprep.subr.mxu0 0.0
    %129 = vmatpush2.msra.mxu0 0.0
    %130 = vmatprep.subr.mxu0 0.0
    %131 = vmatpush2.msra.mxu0 0.0
    %132 = vmatprep.subr.mxu0 0.0
    %133 = vmatpush2.msra.mxu0 0.0
    %134 = vmatprep.subr.mxu0 0.0
    %135 = vmatpush2.msra.mxu0 0.0
    %136 = vmatprep.subr.mxu0 0.0
    %137 = vmatpush2.msra.mxu0 0.0
    %138 = vmatprep.subr.mxu0 0.0
    %139 = vmatpush2.msra.mxu0 0.0
    %140 = vmatprep.subr.mxu0 0.0
    %141 = vmatpush2.msra.mxu0 0.0
    %142 = vmatprep.subr.mxu0 0.0
    %143 = vmatpush2.msra.mxu0 0.0
    %144 = vmatprep.subr.mxu0 0.0
    %145 = vmatpush2.msra.mxu0 0.0
    %146 = vmatprep.subr.mxu0 0.0
    %147 = vmatpush2.msra.mxu0 0.0
    %148 = vmatprep.subr.mxu0 0.0
    %149 = vmatpush2.msra.mxu0 0.0
    %150 = vmatprep.subr.mxu0 0.0
    %151 = vmatpush2.msra.mxu0 0.0
    %152 = vmatprep.subr.mxu0 0.0
    %153 = vmatpush2.msra.mxu0 0.0
    %154 = vmatprep.subr.mxu0 0.0
    %155 = vmatpush2.msra.mxu0 0.0
    %156 = vmatprep.subr.mxu0 0.0
    %157 = vmatpush2.msra.mxu0 0.0
    %158 = vmatprep.mubr.f32.mxu0 0.0
    %159 = vmatmul.mubr.f32.gmra.mxu0 %v71
    %v160 = vpop.f32.mrf.mxu0
    %v161 = vadd.f32 %v92, %v160
    %v162 = vpop.f32.mrf.mxu0
    %163 = vdwg.mxu0
    %vm164 = vcmp.gt.f32.partialorder %v161, 0.0
    %v165 = vmul.f32 %v161, 1.442695
    %v166 = vpow.pop %v165
    %v167 = vsub.f32 %v166, 1.0
    %v168 = vmul.f32 %v167, 1.6732632
    %v169 = vsel %vm164, %v161, %v168
    %v170 = vmul.f32 %v169, 1.050701
    %v171 = vld [vmem:[#allocation9] sm:$0xff]
    %v172 = vld [vmem:[#allocation9 + $0x8] sm:$0xff]
    %v173 = vld [vmem:[#allocation9 + $0x10] sm:$0xff]
    %v174 = vld [vmem:[#allocation9 + $0x18] sm:$0xff]
    %v175 = vld [vmem:[#allocation9 + $0x20] sm:$0xff]
    %v176 = vld [vmem:[#allocation9 + $0x28] sm:$0xff]
    %v177 = vld [vmem:[#allocation9 + $0x30] sm:$0xff]
    %v178 = vld [vmem:[#allocation9 + $0x38] sm:$0xff]
    %v179 = vld [vmem:[#allocation9 + $0x40] sm:$0xff]
    %v180 = vld [vmem:[#allocation9 + $0x48] sm:$0xff]
    %v181 = vld [vmem:[#allocation9 + $0x50] sm:$0xff]
    %v182 = vld [vmem:[#allocation9 + $0x58] sm:$0xff]
    %v183 = vld [vmem:[#allocation9 + $0x60] sm:$0xff]
    %v184 = vld [vmem:[#allocation9 + $0x68] sm:$0xff]
    %v185 = vld [vmem:[#allocation9 + $0x70] sm:$0xff]
    %v186 = vld [vmem:[#allocation9 + $0x78] sm:$0xff]
    %v187 = vld [vmem:[%s6] sm:$0x1]
    %v189 = vlaneseq
    %v190 = vshrl.u32 %v189, 7
    %v191 = vsub.s32 0, %v190
    %v192 = vrot.slane %v187, %v191
    %194 = vmatprep.subr.mxu0 0.0
    %195 = vmatpush1.msra.mxu0 %v186
    %196 = vmatprep.subr.mxu0 0.0
    %197 = vmatpush1.msra.mxu0 %v185
    %198 = vmatprep.subr.mxu0 0.0
    %199 = vmatpush1.msra.mxu0 %v184
    %200 = vmatprep.subr.mxu0 0.0
    %201 = vmatpush1.msra.mxu0 %v183
    %202 = vmatprep.subr.mxu0 0.0
    %203 = vmatpush1.msra.mxu0 %v182
    %204 = vmatprep.subr.mxu0 0.0
    %205 = vmatpush1.msra.mxu0 %v181
    %206 = vmatprep.subr.mxu0 0.0
    %207 = vmatpush1.msra.mxu0 %v180
    %208 = vmatprep.subr.mxu0 0.0
    %209 = vmatpush1.msra.mxu0 %v179
    %210 = vmatprep.subr.mxu0 0.0
    %211 = vmatpush1.msra.mxu0 %v178
    %212 = vmatprep.subr.mxu0 0.0
    %213 = vmatpush1.msra.mxu0 %v177
    %214 = vmatprep.subr.mxu0 0.0
    %215 = vmatpush1.msra.mxu0 %v176
    %216 = vmatprep.subr.mxu0 0.0
    %217 = vmatpush1.msra.mxu0 %v175
    %218 = vmatprep.subr.mxu0 0.0
    %219 = vmatpush1.msra.mxu0 %v174
    %220 = vmatprep.subr.mxu0 0.0
    %221 = vmatpush1.msra.mxu0 %v173
    %222 = vmatprep.subr.mxu0 0.0
    %223 = vmatpush1.msra.mxu0 %v172
    %224 = vmatprep.subr.mxu0 0.0
    %225 = vmatpush1.msra.mxu0 %v171
    %226 = vmatprep.subr.mxu0 0.0
    %227 = vmatpush2.msra.mxu0 0.0
    %228 = vmatprep.subr.mxu0 0.0
    %229 = vmatpush2.msra.mxu0 0.0
    %230 = vmatprep.subr.mxu0 0.0
    %231 = vmatpush2.msra.mxu0 0.0
    %232 = vmatprep.subr.mxu0 0.0
    %233 = vmatpush2.msra.mxu0 0.0
    %234 = vmatprep.subr.mxu0 0.0
    %235 = vmatpush2.msra.mxu0 0.0
    %236 = vmatprep.subr.mxu0 0.0
    %237 = vmatpush2.msra.mxu0 0.0
    %238 = vmatprep.subr.mxu0 0.0
    %239 = vmatpush2.msra.mxu0 0.0
    %240 = vmatprep.subr.mxu0 0.0
    %241 = vmatpush2.msra.mxu0 0.0
    %242 = vmatprep.subr.mxu0 0.0
    %243 = vmatpush2.msra.mxu0 0.0
    %244 = vmatprep.subr.mxu0 0.0
    %245 = vmatpush2.msra.mxu0 0.0
    %246 = vmatprep.subr.mxu0 0.0
    %247 = vmatpush2.msra.mxu0 0.0
    %248 = vmatprep.subr.mxu0 0.0
    %249 = vmatpush2.msra.mxu0 0.0
    %250 = vmatprep.subr.mxu0 0.0
    %251 = vmatpush2.msra.mxu0 0.0
    %252 = vmatprep.subr.mxu0 0.0
    %253 = vmatpush2.msra.mxu0 0.0
    %254 = vmatprep.subr.mxu0 0.0
    %255 = vmatpush2.msra.mxu0 0.0
    %256 = vmatprep.subr.mxu0 0.0
    %257 = vmatpush2.msra.mxu0 0.0
    %258 = vmatprep.mubr.f32.mxu0 0.0
    %259 = vmatmul.mubr.f32.gmra.mxu0 %v170
    %v260 = vpop.f32.mrf.mxu0
    %v261 = vadd.f32 %v192, %v260
    %v262 = vpop.f32.mrf.mxu0
    %263 = vdwg.mxu0
    %264 = vst [vmem:[#allocation10] sm:$0xff] %v261
    // Predicated region
    $region38: #{tpu_custom_call.1} parent=1 // pred_check
      _
    $region39: #{tpu_custom_call.1} parent=1 // pred_check_branch
      %266 = sbr.rel (0) target = $region41
    $region40: #{tpu_custom_call.1} parent=1 // pred_region
      %s268 = ssub.s32 128, 128
      %269 = vsyncadd [#allocation6], %s268
      %s271 = sshll.u32 [#allocation10], 4
      %s272 = int_to_ptr.vmem [resolvable:$true] %s271
      %274 = dma.vmem_to_hbm [thread:$0]  %s272, 128, %s7, [#allocation6]
    $region41: #{tpu_custom_call.1} parent=1 // pred_fallthru
      _
    // Predicated region
    $region42: #{tpu_custom_call.1} parent=1 // pred_check
      _
    $region43: #{tpu_custom_call.1} parent=1 // pred_check_branch
      %276 = sbr.rel (0) target = $region45
    $region44: #{tpu_custom_call.1} parent=1 // pred_region
      %277 = dma.done [#allocation6], 128
    $region45: #{tpu_custom_call.1} parent=1 // pred_fallthru
      _
    %278 = vsyncpa [#allocation5], 1
    %279 = vsyncpa [#allocation8], 1
    %280 = vsyncpa [#allocation6], 1

</llo_original>
